<compile_context>
chip_gen: v7x
topology: tpu7x:2x2x1
jax: 0.10.0
libtpu: 0.0.40
codegen_flags: <defaults>
</compile_context>

<pallas_src>
import functools
import math

import jax
import jax.numpy as jnp
import numpy as np
from jax import lax
from jax.experimental import pallas as pl
from jax.experimental.pallas import tpu as pltpu

# ---------------------------------------------------------------------------
# MXU feed precision.  bf16 inputs + f32 accumulation is the fast path on all
# generations; set to jnp.float32 to recover bit-for-bit fp32 forward parity.
MXU_INPUT_DTYPE = jnp.bfloat16

TILE_M = 256          # matmul row tile
TILE_N = 512          # matmul lane tile
TILE_K = 512          # matmul reduction tile
TILE_ROWS = 256       # LayerNorm row tile
SEQ_TILE = 256        # flash-attention q / kv tile target
CONV_TIME_TILE = 256  # conv frontend time tile target
FULL_N_WEIGHT_BYTES = 12 * 1024 * 1024   # keep weight fully VMEM-resident below this
VMEM_LIMIT = 48 * 1024 * 1024            # below v7x's 64 MiB physical VMEM


def _round_up(x, m):
    return ((x + m - 1) // m) * m


def _pick_tile(dim, target):
    """Largest divisor of `dim` <= target, preferring (128, 8)-aligned tiles.
    Falls back to the full dimension (always a legal block shape)."""
    if dim <= target:
        return dim
    for align in (128, 8):
        t = (target // align) * align
        while t >= align:
            if dim % t == 0:
                return t
            t -= align
    return dim


def _row_tile(m, target):
    """Pick a row tile for an arbitrary row count: returns (tile, padded_m).
    Pads (instead of one full-dim block) when no aligned divisor exists."""
    if m <= target:
        t = _round_up(m, 8)
        return t, t
    t = _pick_tile(m, target)
    if t != m and t % 8 == 0:
        return t, m
    return target, _round_up(m, target)


# ----------------------------- in-kernel math ------------------------------

def _erf(x):
    # Abramowitz & Stegun 7.1.26, max abs error ~1.5e-7.
    a1, a2, a3, a4, a5 = 0.254829592, -0.284496736, 1.421413741, -1.453152027, 1.061405429
    p = 0.3275911
    ax = jnp.abs(x)
    t = 1.0 / (1.0 + p * ax)
    poly = ((((a5 * t + a4) * t + a3) * t + a2) * t + a1) * t
    y = 1.0 - poly * jnp.exp(-ax * ax)
    return jnp.where(x >= 0.0, y, -y)


def _gelu_exact(x):
    return 0.5 * x * (1.0 + _erf(x * 0.7071067811865476))


def _apply_activation(y, activation):
    if activation == "gelu":
        return _gelu_exact(y)
    if activation == "relu":
        return jnp.maximum(y, 0.0)
    return y


# ----------------------- tiled matmul (+bias/act/residual) -----------------

def _matmul_kernel(x_ref, w_ref, b_ref, *rest, activation, has_residual):
    if has_residual:
        res_ref, o_ref, acc_ref = rest
    else:
        o_ref, acc_ref = rest

    @pl.when(pl.program_id(2) == 0)
    def _init():
        acc_ref[...] = jnp.zeros_like(acc_ref)

    xv = x_ref[...].astype(MXU_INPUT_DTYPE)
    wv = w_ref[...].astype(MXU_INPUT_DTYPE)
    acc_ref[...] += jnp.dot(xv, wv, preferred_element_type=jnp.float32)

    @pl.when(pl.program_id(2) == pl.num_programs(2) - 1)
    def _finalize():
        y = acc_ref[...] + b_ref[...]
        y = _apply_activation(y, activation)
        if has_residual:
            y = y + res_ref[...]
        o_ref[...] = y.astype(o_ref.dtype)


def tiled_matmul(x, w, b, *, activation="none", residual=None):
    """y = act(x @ w + b) [+ residual].  x:(M,K) w:(K,N) b:(N,) residual:(M,N)."""
    M, K = x.shape
    N = w.shape[1]
    tm, Mp = _row_tile(M, TILE_M)
    tn = _pick_tile(N, TILE_N)
    tk = _pick_tile(K, TILE_K)
    if Mp != M:
        x = jnp.pad(x, ((0, Mp - M), (0, 0)))
        if residual is not None:
            residual = jnp.pad(residual, ((0, Mp - M), (0, 0)))
    b2 = b.reshape(1, N)

    in_specs = [
        pl.BlockSpec((tm, tk), lambda i, j, k: (i, k)),
        pl.BlockSpec((tk, tn), lambda i, j, k: (k, j)),
        pl.BlockSpec((1, tn), lambda i, j, k: (0, j)),
    ]
    args = [x, w, b2]
    if residual is not None:
        in_specs.append(pl.BlockSpec((tm, tn), lambda i, j, k: (i, j)))
        args.append(residual)

    out = pl.pallas_call(
        functools.partial(_matmul_kernel, activation=activation,
                          has_residual=residual is not None),
        out_shape=jax.ShapeDtypeStruct((Mp, N), jnp.float32),
        grid=(Mp // tm, N // tn, K // tk),
        in_specs=in_specs,
        out_specs=pl.BlockSpec((tm, tn), lambda i, j, k: (i, j)),
        scratch_shapes=[pltpu.VMEM((tm, tn), jnp.float32)],
        compiler_params=pltpu.CompilerParams(
            dimension_semantics=("parallel", "parallel", "arbitrary"),
            vmem_limit_bytes=VMEM_LIMIT),
        cost_estimate=pl.CostEstimate(
            flops=2 * Mp * N * K, transcendentals=0,
            bytes_accessed=4 * (Mp * K + K * N + 2 * Mp * N)),
    )(*args)
    return out[:M] if Mp != M else out


# ---------------- fused LayerNorm + matmul (+bias/activation) ---------------

def _ln_matmul_full_kernel(x_ref, g_ref, bln_ref, w_ref, b_ref, *o_refs,
                           eps, activation, num_splits):
    # Full-N weight residency: LN computed once per row tile, weight DMAed once.
    x = x_ref[...].astype(jnp.float32)                       # (tm, D)
    mu = jnp.mean(x, axis=-1, keepdims=True)
    var = jnp.mean(jnp.square(x - mu), axis=-1, keepdims=True)
    xn = (x - mu) * lax.rsqrt(var + eps) * g_ref[...] + bln_ref[...]
    y = jnp.dot(xn.astype(MXU_INPUT_DTYPE), w_ref[...].astype(MXU_INPUT_DTYPE),
                preferred_element_type=jnp.float32) + b_ref[...]
    y = _apply_activation(y, activation)
    if num_splits == 1:
        o_refs[0][...] = y.astype(o_refs[0].dtype)
    else:
        no = o_refs[0].shape[-1]
        for s in range(num_splits):
            o_refs[s][...] = y[:, s * no:(s + 1) * no].astype(o_refs[s].dtype)


def _ln_matmul_tiled_kernel(x_ref, g_ref, bln_ref, w_ref, b_ref, o_ref, *,
                            eps, activation):
    # Fallback when the full weight does not fit VMEM: LN recomputed per N-tile.
    x = x_ref[...].astype(jnp.float32)
    mu = jnp.mean(x, axis=-1, keepdims=True)
    var = jnp.mean(jnp.square(x - mu), axis=-1, keepdims=True)
    xn = (x - mu) * lax.rsqrt(var + eps) * g_ref[...] + bln_ref[...]
    y = jnp.dot(xn.astype(MXU_INPUT_DTYPE), w_ref[...].astype(MXU_INPUT_DTYPE),
                preferred_element_type=jnp.float32) + b_ref[...]
    o_ref[...] = _apply_activation(y, activation).astype(o_ref.dtype)


def ln_matmul(x, gamma, beta, w, b, *, activation="none", eps=1e-5, num_splits=1):
    """y = act(LayerNorm(x) @ w + b).  Optionally splits the N outputs into
    `num_splits` equal lane-dense arrays (used for the packed QKV projection)."""
    M, D = x.shape
    N = w.shape[1]
    tm, Mp = _row_tile(M, TILE_M)
    if Mp != M:
        x = jnp.pad(x, ((0, Mp - M), (0, 0)))
    g2 = gamma.reshape(1, D)
    bln2 = beta.reshape(1, D)
    b2 = b.reshape(1, N)

    if D * N * 4 <= FULL_N_WEIGHT_BYTES:
        no = N // num_splits
        out_shape = tuple(jax.ShapeDtypeStruct((Mp, no), jnp.float32)
                          for _ in range(num_splits))
        out_specs = tuple(pl.BlockSpec((tm, no), lambda i: (i, 0))
                          for _ in range(num_splits))
        outs = pl.pallas_call(
            functools.partial(_ln_matmul_full_kernel, eps=eps,
                              activation=activation, num_splits=num_splits),
            out_shape=out_shape if num_splits > 1 else out_shape[0],
            grid=(Mp // tm,),
            in_specs=[
                pl.BlockSpec((tm, D), lambda i: (i, 0)),
                pl.BlockSpec((1, D), lambda i: (0, 0)),
                pl.BlockSpec((1, D), lambda i: (0, 0)),
                pl.BlockSpec((D, N), lambda i: (0, 0)),   # full-N weight, resident
                pl.BlockSpec((1, N), lambda i: (0, 0)),
            ],
            out_specs=out_specs if num_splits > 1 else out_specs[0],
            compiler_params=pltpu.CompilerParams(
                dimension_semantics=("parallel",),
                vmem_limit_bytes=VMEM_LIMIT),
            cost_estimate=pl.CostEstimate(
                flops=2 * Mp * N * D, transcendentals=0,
                bytes_accessed=4 * (Mp * D + D * N + Mp * N)),
        )(x, g2, bln2, w, b2)
        outs = tuple(outs) if num_splits > 1 else (outs,)
    else:
        tn = _pick_tile(N, TILE_N)
        y = pl.pallas_call(
            functools.partial(_ln_matmul_tiled_kernel, eps=eps, activation=activation),
            out_shape=jax.ShapeDtypeStruct((Mp, N), jnp.float32),
            grid=(Mp // tm, N // tn),
            in_specs=[
                pl.BlockSpec((tm, D), lambda i, j: (i, 0)),
                pl.BlockSpec((1, D), lambda i, j: (0, 0)),
                pl.BlockSpec((1, D), lambda i, j: (0, 0)),
                pl.BlockSpec((D, tn), lambda i, j: (0, j)),
                pl.BlockSpec((1, tn), lambda i, j: (0, j)),
            ],
            out_specs=pl.BlockSpec((tm, tn), lambda i, j: (i, j)),
            compiler_params=pltpu.CompilerParams(
                dimension_semantics=("parallel", "parallel"),
                vmem_limit_bytes=VMEM_LIMIT),
            cost_estimate=pl.CostEstimate(
                flops=2 * Mp * N * D, transcendentals=0,
                bytes_accessed=4 * (Mp * D + D * N + Mp * N)),
        )(x, g2, bln2, w, b2)
        outs = tuple(jnp.split(y, num_splits, axis=1)) if num_splits > 1 else (y,)

    if Mp != M:
        outs = tuple(o[:M] for o in outs)
    return outs if num_splits > 1 else outs[0]


# ----------------------- LayerNorm (+optional PE add) ----------------------

def _layernorm_kernel(x_ref, g_ref, b_ref, *rest, eps, has_add):
    if has_add:
        add_ref, o_ref = rest
    else:
        (o_ref,) = rest
    x = x_ref[...].astype(jnp.float32)                       # (1, ts, D)
    mu = jnp.mean(x, axis=-1, keepdims=True)
    var = jnp.mean(jnp.square(x - mu), axis=-1, keepdims=True)
    y = (x - mu) * lax.rsqrt(var + eps) * g_ref[...] + b_ref[...]
    if has_add:
        y = y + add_ref[...]
    o_ref[...] = y.astype(o_ref.dtype)


def layernorm(x, gamma, beta, *, add=None, eps=1e-5):
    """LayerNorm over last dim of x:(B,S,D); optional post-LN add of (S,D)."""
    B, S, D = x.shape
    ts, Sp = _row_tile(S, TILE_ROWS)
    if Sp != S:
        x = jnp.pad(x, ((0, 0), (0, Sp - S), (0, 0)))
        if add is not None:
            add = jnp.pad(add, ((0, Sp - S), (0, 0)))
    in_specs = [
        pl.BlockSpec((1, ts, D), lambda b, s: (b, s, 0)),
        pl.BlockSpec((1, D), lambda b, s: (0, 0)),
        pl.BlockSpec((1, D), lambda b, s: (0, 0)),
    ]
    args = [x, gamma.reshape(1, D), beta.reshape(1, D)]
    if add is not None:
        in_specs.append(pl.BlockSpec((ts, D), lambda b, s: (s, 0)))
        args.append(add)
    out = pl.pallas_call(
        functools.partial(_layernorm_kernel, eps=eps, has_add=add is not None),
        out_shape=jax.ShapeDtypeStruct((B, Sp, D), jnp.float32),
        grid=(B, Sp // ts),
        in_specs=in_specs,
        out_specs=pl.BlockSpec((1, ts, D), lambda b, s: (b, s, 0)),
        compiler_params=pltpu.CompilerParams(
            dimension_semantics=("parallel", "parallel")),
    )(*args)
    return out[:, :S] if Sp != S else out


# --------------------- flash-style multi-head attention ---------------------

def _flash_attn_kernel(q_ref, k_ref, v_ref, m_ref, o_ref,
                       m_sc, l_sc, acc_sc, *, n_heads, d_head, scale):
    ki = pl.program_id(2)

    @pl.when(ki == 0)
    def _init():
        m_sc[...] = jnp.full(m_sc.shape, -jnp.inf, m_sc.dtype)
        l_sc[...] = jnp.zeros_like(l_sc)
        acc_sc[...] = jnp.zeros_like(acc_sc)

    q = q_ref[0]                                             # (tq, D)
    k = k_ref[0]                                             # (tk, D)
    v = v_ref[0]                                             # (tk, D)
    madd = m_ref[0]                                          # (1, tk) additive mask

    for h in range(n_heads):                                 # static unroll
        lo = h * d_head
        hi = lo + d_head
        qh = (q[:, lo:hi] * scale).astype(MXU_INPUT_DTYPE)
        kh = k[:, lo:hi].astype(MXU_INPUT_DTYPE)
        vh = v[:, lo:hi].astype(MXU_INPUT_DTYPE)
        # QK^T without materializing a transpose (contract last dims on MXU).
        s = lax.dot_general(qh, kh, (((1,), (1,)), ((), ())),
                            preferred_element_type=jnp.float32)
        s = s + madd                                         # key-padding mask
        m_prev = m_sc[h]                                     # (tq, 1)
        m_new = jnp.maximum(m_prev, jnp.max(s, axis=-1, keepdims=True))
        alpha = jnp.exp(m_prev - m_new)
        p = jnp.exp(s - m_new)
        l_sc[h] = alpha * l_sc[h] + jnp.sum(p, axis=-1, keepdims=True)
        m_sc[h] = m_new
        acc_sc[:, lo:hi] = alpha * acc_sc[:, lo:hi] + jnp.dot(
            p.astype(MXU_INPUT_DTYPE), vh, preferred_element_type=jnp.float32)

    @pl.when(ki == pl.num_programs(2) - 1)
    def _finalize():
        for h in range(n_heads):
            lo = h * d_head
            hi = lo + d_head
            acc_sc[:, lo:hi] = acc_sc[:, lo:hi] / l_sc[h]    # exact normalize
        o_ref[0] = acc_sc[...].astype(o_ref.dtype)           # one lane-dense store


def flash_mha(q, k, v, mask_add, n_heads):
    """q,k,v: (B, S, D); mask_add: (B, S) additive key mask.  Returns (B, S, D)."""
    B, S, D = q.shape
    d_head = D // n_heads
    t, Sp = _row_tile(S, SEQ_TILE)
    if Sp != S:
        pad = Sp - S
        q = jnp.pad(q, ((0, 0), (0, pad), (0, 0)))
        k = jnp.pad(k, ((0, 0), (0, pad), (0, 0)))
        v = jnp.pad(v, ((0, 0), (0, pad), (0, 0)))
        mask_add = jnp.pad(mask_add, ((0, 0), (0, pad)), constant_values=-1e9)
    mask3 = mask_add.reshape(B, 1, Sp)
    n_q = Sp // t
    n_k = Sp // t

    out = pl.pallas_call(
        functools.partial(_flash_attn_kernel, n_heads=n_heads, d_head=d_head,
                          scale=1.0 / math.sqrt(d_head)),
        out_shape=jax.ShapeDtypeStruct((B, Sp, D), jnp.float32),
        grid=(B, n_q, n_k),
        in_specs=[
            pl.BlockSpec((1, t, D), lambda b, qi, ki: (b, qi, 0)),
            pl.BlockSpec((1, t, D), lambda b, qi, ki: (b, ki, 0)),
            pl.BlockSpec((1, t, D), lambda b, qi, ki: (b, ki, 0)),
            pl.BlockSpec((1, 1, t), lambda b, qi, ki: (b, 0, ki)),
        ],
        out_specs=pl.BlockSpec((1, t, D), lambda b, qi, ki: (b, qi, 0)),
        scratch_shapes=[
            pltpu.VMEM((n_heads, t, 1), jnp.float32),   # running max per head
            pltpu.VMEM((n_heads, t, 1), jnp.float32),   # running sum per head
            pltpu.VMEM((t, D), jnp.float32),            # lane-dense accumulator
        ],
        compiler_params=pltpu.CompilerParams(
            dimension_semantics=("parallel", "parallel", "arbitrary"),
            vmem_limit_bytes=VMEM_LIMIT),
        cost_estimate=pl.CostEstimate(
            flops=4 * B * n_heads * Sp * Sp * d_head,
            transcendentals=B * n_heads * Sp * Sp,
            bytes_accessed=4 * (4 * B * Sp * D + B * Sp)),
    )(q, k, v, mask3)
    return out[:, :S] if Sp != S else out


# ----------------- conv frontend (time-tiled, in-kernel taps) ---------------

def _conv_kernel(*refs, tap_map, n_streams, t_out):
    main_refs = refs[:n_streams]
    halo_refs = refs[n_streams:2 * n_streams]
    w_ref, b_ref, o_ref = refs[2 * n_streams:]
    # Stitch each stream's (tt, Cin) main block with its tiny halo tail.
    wins = []
    for s in range(n_streams):
        wins.append(jnp.concatenate([main_refs[s][0], halo_refs[s][0, 0]], axis=0))
    cout = o_ref.shape[-1]
    acc = jnp.zeros((t_out, cout), jnp.float32)
    # TODO(synk): the off>0 taps are sublane-unaligned slices; pltpu.roll on the
    # XLU could hide the shift under the MXU accumulation.
    for tap_idx, (s, off) in enumerate(tap_map):
        xk = wins[s][off:off + t_out, :]
        acc += jnp.dot(xk.astype(MXU_INPUT_DTYPE),
                       w_ref[tap_idx].astype(MXU_INPUT_DTYPE),
                       preferred_element_type=jnp.float32)
    o_ref[0] = _gelu_exact(acc + b_ref[...]).astype(o_ref.dtype)


def conv1d_gelu(x_tc, w, b, *, stride):
    """Conv1d(kernel=5, padding=2, stride=stride) + GELU, time-tiled.
    x_tc: (B, T, Cin) time-major; w: (Cout, Cin, K); returns (B, T_out, Cout)."""
    B, T, Cin = x_tc.shape
    Cout, _, K = w.shape
    pad = 2
    T_out = (T + 2 * pad - K) // stride + 1
    tt, T_out_p = _row_tile(T_out, CONV_TIME_TILE)
    n_tiles = T_out_p // tt
    w_kio = jnp.transpose(w, (2, 1, 0))                      # (K, Cin, Cout)
    b2 = b.reshape(1, Cout)

    if stride == 1:
        halo = K - 1                                         # 4 extra rows per tile
        need = T_out_p + halo
        xp = jnp.pad(x_tc, ((0, 0), (pad, need - T - pad), (0, 0)))
        idx = (jnp.arange(n_tiles)[:, None] + 1) * tt + jnp.arange(halo)[None, :]
        streams_main = [xp[:, :T_out_p]]
        streams_halo = [xp[:, idx]]                          # (B, n_tiles, halo, Cin)
        tap_map = tuple((0, k) for k in range(K))
    else:
        # Even/odd time split so every tap of the stride-2 conv is a contiguous
        # static slice; each stream gets its own 2-row halo per tile.
        halo = 2
        need_eo = T_out_p + halo
        need = 2 * need_eo
        xp = jnp.pad(x_tc, ((0, 0), (pad, need - T - pad), (0, 0)))
        e = xp[:, 0::2]
        o = xp[:, 1::2]
        idx = (jnp.arange(n_tiles)[:, None] + 1) * tt + jnp.arange(halo)[None, :]
        streams_main = [e[:, :T_out_p], o[:, :T_out_p]]
        streams_halo = [e[:, idx], o[:, idx]]
        tap_map = tuple((k % 2, k // 2) for k in range(K))

    n_streams = len(streams_main)
    in_specs = (
        [pl.BlockSpec((1, tt, Cin), lambda bi, ti: (bi, ti, 0))
         for _ in streams_main] +
        [pl.BlockSpec((1, 1, halo, Cin), lambda bi, ti: (bi, ti, 0, 0))
         for _ in streams_halo] +
        [pl.BlockSpec((K, Cin, Cout), lambda bi, ti: (0, 0, 0)),
         pl.BlockSpec((1, Cout), lambda bi, ti: (0, 0))])

    out = pl.pallas_call(
        functools.partial(_conv_kernel, tap_map=tap_map,
                          n_streams=n_streams, t_out=tt),
        out_shape=jax.ShapeDtypeStruct((B, T_out_p, Cout), jnp.float32),
        grid=(B, n_tiles),
        in_specs=in_specs,
        out_specs=pl.BlockSpec((1, tt, Cout), lambda bi, ti: (bi, ti, 0)),
        compiler_params=pltpu.CompilerParams(
            dimension_semantics=("parallel", "parallel"),
            vmem_limit_bytes=VMEM_LIMIT),
        cost_estimate=pl.CostEstimate(
            flops=2 * B * T_out_p * Cin * Cout * K,
            transcendentals=B * T_out_p * Cout,
            bytes_accessed=4 * (B * T * Cin + K * Cin * Cout + B * T_out_p * Cout)),
    )(*streams_main, *streams_halo, w_kio, b2)
    return out[:, :T_out] if T_out_p != T_out else out


# ------------------------------ glue (JAX) ---------------------------------

def sinusoidal_pe(S, D):
    pos = np.arange(S, dtype=np.float32)[:, None]
    i = np.arange(0, D, 2, dtype=np.float32)[None, :]
    angle = pos / np.power(10000.0, i / D)
    pe = np.zeros((S, D), dtype=np.float32)
    pe[:, 0::2] = np.sin(angle)
    pe[:, 1::2] = np.cos(angle)
    return jnp.asarray(pe)


def encoder_forward(params, x, mask):
    """x: (B, n_mels, T) float32; mask: (B, T) additive float mask or None."""
    # --- conv frontend: Conv1d+GELU, Conv1d(stride 2)+GELU (dropout = id) ---
    x_tc = jnp.transpose(x, (0, 2, 1))                       # (B, T, n_mels)
    h = conv1d_gelu(x_tc, params["conv1_w"], params["conv1_b"], stride=1)
    h = conv1d_gelu(h, params["conv2_w"], params["conv2_b"], stride=2)
    B, S, D = h.shape                                        # already batch-first

    # mask downsample: F.max_pool1d(mask, kernel=3, stride=2, padding=1)
    if mask is not None:
        pooled = lax.reduce_window(
            mask, -jnp.inf, lax.max,
            window_dimensions=(1, 3), window_strides=(1, 2),
            padding=((0, 0), (1, 1)))
    else:
        pooled = None
    mask_add = pooled if pooled is not None else jnp.zeros((B, S), jnp.float32)

    # conv LayerNorm fused with the sinusoidal positional-encoding add
    h = layernorm(h, params["conv_ln_g"], params["conv_ln_b"],
                  add=sinusoidal_pe(S, D))

    n_heads = params["n_heads"]
    x2 = h.reshape(B * S, D)
    for layer in params["layers"]:
        # --- self-attention block (norm_first): LN1 fused into the QKV proj,
        #     q/k/v emitted as three lane-dense outputs ---
        q, k, v = ln_matmul(x2, layer["ln1_g"], layer["ln1_b"],
                            layer["w_qkv"], layer["b_qkv"], num_splits=3)
        attn = flash_mha(q.reshape(B, S, D), k.reshape(B, S, D),
                         v.reshape(B, S, D), mask_add, n_heads)
        # out-proj with residual add fused
        x2 = tiled_matmul(attn.reshape(B * S, D), layer["w_out"], layer["b_out"],
                          residual=x2)
        # --- feed-forward block (norm_first, ReLU): LN2 fused into FF1 ---
        ff = ln_matmul(x2, layer["ln2_g"], layer["ln2_b"],
                       layer["w1"], layer["b1"], activation="relu")
        x2 = tiled_matmul(ff, layer["w2"], layer["b2"], residual=x2)

    out = layernorm(x2.reshape(B, S, D),
                    params["final_ln_g"], params["final_ln_b"])
    return out, pooled


# --------------------------- parameter init --------------------------------

def init_params(key, n_mels, d_model, d_ff, n_heads, n_layers):
    keys = iter(jax.random.split(key, 4 + 8 * n_layers))

    def nrm(shape, scale=0.1):
        return scale * jax.random.normal(next(keys), shape, jnp.float32)

    params = {
        "n_heads": n_heads,
        "conv1_w": nrm((d_model, n_mels, 5)),
        "conv1_b": nrm((d_model,)),
        "conv2_w": nrm((d_model, d_model, 5)),
        "conv2_b": nrm((d_model,)),
        "conv_ln_g": jnp.ones((d_model,), jnp.float32),
        "conv_ln_b": jnp.zeros((d_model,), jnp.float32),
        "final_ln_g": jnp.ones((d_model,), jnp.float32),
        "final_ln_b": jnp.zeros((d_model,), jnp.float32),
        "layers": [],
    }
    for _ in range(n_layers):
        params["layers"].append({
            "ln1_g": jnp.ones((d_model,), jnp.float32),
            "ln1_b": jnp.zeros((d_model,), jnp.float32),
            "w_qkv": nrm((d_model, 3 * d_model)),   # in_proj_weight.T
            "b_qkv": nrm((3 * d_model,)),
            "w_out": nrm((d_model, d_model)),       # out_proj.weight.T
            "b_out": nrm((d_model,)),
            "ln2_g": jnp.ones((d_model,), jnp.float32),
            "ln2_b": jnp.zeros((d_model,), jnp.float32),
            "w1": nrm((d_model, d_ff)),             # linear1.weight.T
            "b1": nrm((d_ff,)),
            "w2": nrm((d_ff, d_model)),             # linear2.weight.T
            "b2": nrm((d_model,)),
        })
    return params


# --------------------------------- main -------------------------------------

if __name__ == "__main__":
    # Small but lane-aligned toy dims (d_model multiple of 128 keeps every
    # attention / matmul block lane-dense, matching real deployments).
    B, n_mels, T = 2, 8, 16
    d_model, d_ff, n_heads, n_layers = 128, 256, 4, 2

    key = jax.random.PRNGKey(0)
    kx, kp = jax.random.split(key)

    x = jax.random.normal(kx, (B, n_mels, T), jnp.float32)
    # additive key-padding mask: 0 = valid, -1e9 = padded (batch 1 has padding)
    mask = jnp.zeros((B, T), jnp.float32).at[1, 10:].set(-1e9)

    params = init_params(kp, n_mels, d_model, d_ff, n_heads, n_layers)

    out, pooled = encoder_forward(params, x, mask)
    out = jax.block_until_ready(out)
    pooled = jax.block_until_ready(pooled)

    assert out.shape == (B, T // 2, d_model), out.shape
    assert pooled.shape == (B, T // 2), pooled.shape
    assert bool(jnp.all(jnp.isfinite(out)))
    print("KERNEL_OK")
</pallas_src>

<mosaic_0001>
module attributes {stable_mosaic.version = 11 : i64} {
  func.func @_conv_kernel(%arg0: i32, %arg1: i32, %arg2: memref<1x16x8xf32, #tpu.memory_space<vmem>>, %arg3: memref<1x1x4x8xf32, #tpu.memory_space<vmem>>, %arg4: memref<5x8x128xf32, #tpu.memory_space<vmem>>, %arg5: memref<1x128xf32, #tpu.memory_space<vmem>>, %arg6: memref<1x16x128xf32, #tpu.memory_space<vmem>>) attributes {dimension_semantics = [#tpu.dimension_semantics<parallel>, #tpu.dimension_semantics<parallel>], iteration_bounds = array<i64: 2, 1>, scalar_prefetch = 0 : i64, scratch_operands = 0 : i64, tpu.core_type = #tpu.core_type<tc>, window_params = [{transform_indices = @transform_0, window_bounds = array<i64: 1, 16, 8>}, {transform_indices = @transform_1, window_bounds = array<i64: 1, 1, 4, 8>}, {pipeline_mode = #tpu.pipeline_mode<synchronous>, transform_indices = @transform_2, window_bounds = array<i64: 5, 8, 128>}, {pipeline_mode = #tpu.pipeline_mode<synchronous>, transform_indices = @transform_3, window_bounds = array<i64: 1, 128>}, {transform_indices = @transform_4, window_bounds = array<i64: 1, 16, 128>}]} {
    %c0 = arith.constant 0 : index
    %c0_0 = arith.constant 0 : index
    %c0_1 = arith.constant 0 : index
    %0 = vector.load %arg2[%c0, %c0_0, %c0_1] : memref<1x16x8xf32, #tpu.memory_space<vmem>>, vector<1x16x8xf32>
    %1 = vector.shape_cast %0 : vector<1x16x8xf32> to vector<16x8xf32>
    %c0_2 = arith.constant 0 : index
    %c0_3 = arith.constant 0 : index
    %c0_4 = arith.constant 0 : index
    %c0_5 = arith.constant 0 : index
    %2 = vector.load %arg3[%c0_2, %c0_3, %c0_4, %c0_5] : memref<1x1x4x8xf32, #tpu.memory_space<vmem>>, vector<1x1x4x8xf32>
    %3 = vector.shape_cast %2 : vector<1x1x4x8xf32> to vector<4x8xf32>
    %4 = tpu.concatenate %1, %3 in 0 : vector<16x8xf32>, vector<4x8xf32> -> vector<20x8xf32>
    %cst = arith.constant 0.000000e+00 : f32
    %5 = vector.broadcast %cst : f32 to vector<16x128xf32>
    %6 = vector.extract_strided_slice %4 {offsets = [0, 0], sizes = [16, 8], strides = [1, 1]} : vector<20x8xf32> to vector<16x8xf32>
    %7 = arith.truncf %6 : vector<16x8xf32> to vector<16x8xbf16>
    %c0_6 = arith.constant 0 : index
    %c0_7 = arith.constant 0 : index
    %c0_8 = arith.constant 0 : index
    %8 = vector.load %arg4[%c0_6, %c0_7, %c0_8] : memref<5x8x128xf32, #tpu.memory_space<vmem>>, vector<1x8x128xf32>
    %9 = vector.shape_cast %8 : vector<1x8x128xf32> to vector<8x128xf32>
    %10 = arith.truncf %9 : vector<8x128xf32> to vector<8x128xbf16>
    %cst_9 = arith.constant dense<0.000000e+00> : vector<16x128xf32>
    %11 = tpu.matmul %7, %10, %cst_9 {dimension_numbers = #tpu.dot_dimension_numbers<[1], [0], [0], [1], [0, 0, 1, 1], [], []>} : vector<16x8xbf16>, vector<8x128xbf16>, vector<16x128xf32> -> vector<16x128xf32>
    %12 = arith.addf %5, %11 : vector<16x128xf32>
    %13 = vector.extract_strided_slice %4 {offsets = [1, 0], sizes = [16, 8], strides = [1, 1]} : vector<20x8xf32> to vector<16x8xf32>
    %14 = arith.truncf %13 : vector<16x8xf32> to vector<16x8xbf16>
    %c1 = arith.constant 1 : index
    %c0_10 = arith.constant 0 : index
    %c0_11 = arith.constant 0 : index
    %15 = vector.load %arg4[%c1, %c0_10, %c0_11] : memref<5x8x128xf32, #tpu.memory_space<vmem>>, vector<1x8x128xf32>
    %16 = vector.shape_cast %15 : vector<1x8x128xf32> to vector<8x128xf32>
    %17 = arith.truncf %16 : vector<8x128xf32> to vector<8x128xbf16>
    %cst_12 = arith.constant dense<0.000000e+00> : vector<16x128xf32>
    %18 = tpu.matmul %14, %17, %cst_12 {dimension_numbers = #tpu.dot_dimension_numbers<[1], [0], [0], [1], [0, 0, 1, 1], [], []>} : vector<16x8xbf16>, vector<8x128xbf16>, vector<16x128xf32> -> vector<16x128xf32>
    %19 = arith.addf %12, %18 : vector<16x128xf32>
    %20 = vector.extract_strided_slice %4 {offsets = [2, 0], sizes = [16, 8], strides = [1, 1]} : vector<20x8xf32> to vector<16x8xf32>
    %21 = arith.truncf %20 : vector<16x8xf32> to vector<16x8xbf16>
    %c2 = arith.constant 2 : index
    %c0_13 = arith.constant 0 : index
    %c0_14 = arith.constant 0 : index
    %22 = vector.load %arg4[%c2, %c0_13, %c0_14] : memref<5x8x128xf32, #tpu.memory_space<vmem>>, vector<1x8x128xf32>
    %23 = vector.shape_cast %22 : vector<1x8x128xf32> to vector<8x128xf32>
    %24 = arith.truncf %23 : vector<8x128xf32> to vector<8x128xbf16>
    %cst_15 = arith.constant dense<0.000000e+00> : vector<16x128xf32>
    %25 = tpu.matmul %21, %24, %cst_15 {dimension_numbers = #tpu.dot_dimension_numbers<[1], [0], [0], [1], [0, 0, 1, 1], [], []>} : vector<16x8xbf16>, vector<8x128xbf16>, vector<16x128xf32> -> vector<16x128xf32>
    %26 = arith.addf %19, %25 : vector<16x128xf32>
    %27 = vector.extract_strided_slice %4 {offsets = [3, 0], sizes = [16, 8], strides = [1, 1]} : vector<20x8xf32> to vector<16x8xf32>
    %28 = arith.truncf %27 : vector<16x8xf32> to vector<16x8xbf16>
    %c3 = arith.constant 3 : index
    %c0_16 = arith.constant 0 : index
    %c0_17 = arith.constant 0 : index
    %29 = vector.load %arg4[%c3, %c0_16, %c0_17] : memref<5x8x128xf32, #tpu.memory_space<vmem>>, vector<1x8x128xf32>
    %30 = vector.shape_cast %29 : vector<1x8x128xf32> to vector<8x128xf32>
    %31 = arith.truncf %30 : vector<8x128xf32> to vector<8x128xbf16>
    %cst_18 = arith.constant dense<0.000000e+00> : vector<16x128xf32>
    %32 = tpu.matmul %28, %31, %cst_18 {dimension_numbers = #tpu.dot_dimension_numbers<[1], [0], [0], [1], [0, 0, 1, 1], [], []>} : vector<16x8xbf16>, vector<8x128xbf16>, vector<16x128xf32> -> vector<16x128xf32>
    %33 = arith.addf %26, %32 : vector<16x128xf32>
    %34 = vector.extract_strided_slice %4 {offsets = [4, 0], sizes = [16, 8], strides = [1, 1]} : vector<20x8xf32> to vector<16x8xf32>
    %35 = arith.truncf %34 : vector<16x8xf32> to vector<16x8xbf16>
    %c4 = arith.constant 4 : index
    %c0_19 = arith.constant 0 : index
    %c0_20 = arith.constant 0 : index
    %36 = vector.load %arg4[%c4, %c0_19, %c0_20] : memref<5x8x128xf32, #tpu.memory_space<vmem>>, vector<1x8x128xf32>
    %37 = vector.shape_cast %36 : vector<1x8x128xf32> to vector<8x128xf32>
    %38 = arith.truncf %37 : vector<8x128xf32> to vector<8x128xbf16>
    %cst_21 = arith.constant dense<0.000000e+00> : vector<16x128xf32>
    %39 = tpu.matmul %35, %38, %cst_21 {dimension_numbers = #tpu.dot_dimension_numbers<[1], [0], [0], [1], [0, 0, 1, 1], [], []>} : vector<16x8xbf16>, vector<8x128xbf16>, vector<16x128xf32> -> vector<16x128xf32>
    %40 = arith.addf %33, %39 : vector<16x128xf32>
    %c0_22 = arith.constant 0 : index
    %c0_23 = arith.constant 0 : index
    %41 = vector.load %arg5[%c0_22, %c0_23] : memref<1x128xf32, #tpu.memory_space<vmem>>, vector<1x128xf32>
    %42 = vector.broadcast %41 : vector<1x128xf32> to vector<16x128xf32>
    %43 = arith.addf %40, %42 : vector<16x128xf32>
    %cst_24 = arith.constant 5.000000e-01 : f32
    %44 = vector.broadcast %cst_24 : f32 to vector<16x128xf32>
    %45 = arith.mulf %44, %43 : vector<16x128xf32>
    %cst_25 = arith.constant 0.707106769 : f32
    %46 = vector.broadcast %cst_25 : f32 to vector<16x128xf32>
    %47 = arith.mulf %43, %46 : vector<16x128xf32>
    %48 = math.absf %47 : vector<16x128xf32>
    %cst_26 = arith.constant 0.327591091 : f32
    %49 = vector.broadcast %cst_26 : f32 to vector<16x128xf32>
    %50 = arith.mulf %49, %48 : vector<16x128xf32>
    %cst_27 = arith.constant 1.000000e+00 : f32
    %51 = vector.broadcast %cst_27 : f32 to vector<16x128xf32>
    %52 = arith.addf %51, %50 : vector<16x128xf32>
    %cst_28 = arith.constant 1.000000e+00 : f32
    %53 = vector.broadcast %cst_28 : f32 to vector<16x128xf32>
    %54 = arith.divf %53, %52 : vector<16x128xf32>
    %cst_29 = arith.constant 1.06140542 : f32
    %55 = vector.broadcast %cst_29 : f32 to vector<16x128xf32>
    %56 = arith.mulf %55, %54 : vector<16x128xf32>
    %cst_30 = arith.constant -1.45315206 : f32
    %57 = vector.broadcast %cst_30 : f32 to vector<16x128xf32>
    %58 = arith.addf %56, %57 : vector<16x128xf32>
    %59 = arith.mulf %58, %54 : vector<16x128xf32>
    %cst_31 = arith.constant 1.42141378 : f32
    %60 = vector.broadcast %cst_31 : f32 to vector<16x128xf32>
    %61 = arith.addf %59, %60 : vector<16x128xf32>
    %62 = arith.mulf %61, %54 : vector<16x128xf32>
    %cst_32 = arith.constant -0.284496725 : f32
    %63 = vector.broadcast %cst_32 : f32 to vector<16x128xf32>
    %64 = arith.addf %62, %63 : vector<16x128xf32>
    %65 = arith.mulf %64, %54 : vector<16x128xf32>
    %cst_33 = arith.constant 0.254829586 : f32
    %66 = vector.broadcast %cst_33 : f32 to vector<16x128xf32>
    %67 = arith.addf %65, %66 : vector<16x128xf32>
    %68 = arith.mulf %67, %54 : vector<16x128xf32>
    %cst_34 = arith.constant 0.000000e+00 : f32
    %69 = vector.broadcast %cst_34 : f32 to vector<16x128xf32>
    %70 = arith.subf %69, %48 : vector<16x128xf32>
    %71 = arith.mulf %70, %48 : vector<16x128xf32>
    %72 = math.exp %71 : vector<16x128xf32>
    %73 = arith.mulf %68, %72 : vector<16x128xf32>
    %cst_35 = arith.constant 1.000000e+00 : f32
    %74 = vector.broadcast %cst_35 : f32 to vector<16x128xf32>
    %75 = arith.subf %74, %73 : vector<16x128xf32>
    %cst_36 = arith.constant 0.000000e+00 : f32
    %76 = vector.broadcast %cst_36 : f32 to vector<16x128xf32>
    %77 = arith.cmpf oge, %47, %76 : vector<16x128xf32>
    %cst_37 = arith.constant 0.000000e+00 : f32
    %78 = vector.broadcast %cst_37 : f32 to vector<16x128xf32>
    %79 = arith.subf %78, %75 : vector<16x128xf32>
    %80 = arith.select %77, %75, %79 : vector<16x128xi1>, vector<16x128xf32>
    %cst_38 = arith.constant 1.000000e+00 : f32
    %81 = vector.broadcast %cst_38 : f32 to vector<16x128xf32>
    %82 = arith.addf %81, %80 : vector<16x128xf32>
    %83 = arith.mulf %45, %82 : vector<16x128xf32>
    %c0_39 = arith.constant 0 : index
    %c0_40 = arith.constant 0 : index
    %c0_41 = arith.constant 0 : index
    %84 = vector.load %arg6[%c0_39, %c0_40, %c0_41] : memref<1x16x128xf32, #tpu.memory_space<vmem>>, vector<1x16x128xf32>
    %85 = vector.shape_cast %84 : vector<1x16x128xf32> to vector<16x128xf32>
    %86 = vector.shape_cast %83 : vector<16x128xf32> to vector<1x16x128xf32>
    tpu.vector_store %arg6[%c0_39, %c0_40, %c0_41], %86 {strides = array<i32>} : memref<1x16x128xf32, #tpu.memory_space<vmem>>, vector<1x16x128xf32>,
    return
  }
  func.func @transform_0(%arg0: i32, %arg1: i32) -> (i32, i32, i32) {
    %c0_i32 = arith.constant 0 : i32
    %c0_i32_0 = arith.constant 0 : i32
    return %arg0, %arg1, %c0_i32 : i32, i32, i32
  }
  func.func @transform_1(%arg0: i32, %arg1: i32) -> (i32, i32, i32, i32) {
    %c0_i32 = arith.constant 0 : i32
    %c0_i32_0 = arith.constant 0 : i32
    %c0_i32_1 = arith.constant 0 : i32
    return %arg0, %arg1, %c0_i32, %c0_i32_0 : i32, i32, i32, i32
  }
  func.func @transform_2(%arg0: i32, %arg1: i32) -> (i32, i32, i32) {
    %c0_i32 = arith.constant 0 : i32
    %c0_i32_0 = arith.constant 0 : i32
    %c0_i32_1 = arith.constant 0 : i32
    %c0_i32_2 = arith.constant 0 : i32
    return %c0_i32, %c0_i32_0, %c0_i32_1 : i32, i32, i32
  }
  func.func @transform_3(%arg0: i32, %arg1: i32) -> (i32, i32) {
    %c0_i32 = arith.constant 0 : i32
    %c0_i32_0 = arith.constant 0 : i32
    %c0_i32_1 = arith.constant 0 : i32
    return %c0_i32, %c0_i32_0 : i32, i32
  }
  func.func @transform_4(%arg0: i32, %arg1: i32) -> (i32, i32, i32) {
    %c0_i32 = arith.constant 0 : i32
    %c0_i32_0 = arith.constant 0 : i32
    return %arg0, %arg1, %c0_i32 : i32, i32, i32
  }
}

</mosaic_0001>

<llo_original>
// kernel: tpu_custom_call.1
$region0: #{tpu_custom_call.1}
  #allocation0 [shape = 'u32[]', space=smem, size = 0x4, offset = 0x4, fixed_abs, tag = 'smem constant byte address 0x4 - core index']
  #allocation1 [shape = 'u32[144,128]{1,0:T(1,128)}', space=vmem, size = 0x12000, scoped, tag = 'internal scratch']
  %s0 = inlined_call_operand.vmem [shape: f32[2,16,8], index: 0, kind: input, shape index: {}]
  %s1 = inlined_call_operand.vmem [shape: f32[2,1,4,8], index: 1, kind: input, shape index: {}]
  %s2 = inlined_call_operand.vmem [shape: f32[5,8,128], index: 2, kind: input, shape index: {}]
  %s3 = inlined_call_operand.vmem [shape: f32[1,128], index: 3, kind: input, shape index: {}]
  %s4 = inlined_call_operand.hbm [shape: f32[2,16,128], index: 4, kind: output, shape index: {}]
  %s5 = sld [smem:[#allocation0]]
  $region49: #{tpu_custom_call.1} parent=0
    _
  %s7 = ssub.s32 1, %s5
  %s8 = scalar_select 0, %s7, %s5
  $region1: #{tpu_custom_call.1} parent=0
    #allocation2 [shape = 'u8[16384]{0}', space=vmem, size = 0x4000, scoped, tag = 'output window, operand 0']
    #allocation3 [shape = 's32[2]{0}', space=sflag, size = 0x8, scoped, tag = 'scoped memory for tpu_custom_call.1']
    %9 = vsyncpa [#allocation3], 0
    %s10 = scalar_lea.sflag [#allocation3], 1
    %11 = vsyncpa %s10, 0
    loop: start=0, step=1, limit=4
    $region2: #{tpu_custom_call.1} parent=1 // loop_pre_header
      _
    $region3: #{tpu_custom_call.1} parent=1 // loop_header
      %s13 = sphi 0, %s17
      %p14 = scmp.ge.s32.totalorder %s13, 4
      %s20 = sphi 0, %s32
      %s21 = sphi 0, %s28
      %s22 = sphi 0, %s20
      %s23 = sphi 0, %s21
      %s24 = sphi 0, %s22
      %s25 = sphi 0, %s23
      %s37 = sphi 0, %s39
      %s40 = sphi 0, %s37
      %s41 = sphi 0, %s40
      %s57 = sphi 0, %s41
      %s65 = sphi 0, %s67
      %s68 = sphi 0, %s65
      %s69 = sphi 0, %s68
      %s85 = sphi 0, %s69
      %s89 = sphi 0, %s89
      %s91 = sphi 0, %s89
      %s92 = sphi 0, %s91
      %s106 = sphi 0, %s92
      %s110 = sphi 0, %s110
      %s112 = sphi 0, %s110
      %s113 = sphi 0, %s112
      %s127 = sphi 0, %s113
      %s135 = sphi 0, %s137
      %s138 = sphi 0, %s135
      %s139 = sphi 0, %s138
      %s155 = sphi 0, %s139
    $region4: #{tpu_custom_call.1} parent=1 // loop_header_branch
      %16 = sbr.rel (%p14) target = $region8
    $region5: #{tpu_custom_call.1} parent=1 // loop_body
      %s18 = ssub.s32 %s13, 1
      %s19 = ssub.s32 %s13, 2
      %s26 = sadd.s32 1, %s21
      %p27 = scmp.ge.s32.totalorder %s26, 1
      %s28 = scalar_select %p27, 0, %s26
      %s29 = sadd.s32 1, %s20
      %s30 = scalar_select %p27, %s29, %s20
      %p31 = scmp.ge.s32.totalorder %s30, 2
      %s32 = scalar_select %p31, 0, %s30
      %s33 = ssub.s32 %s20, %s32
      %s34 = ssub.s32 %s21, %s28
      %s35 = sor.u32 %s33, %s34
      %p36 = scmp.eq.s32.totalorder %s35, 0
      %s38 = sadd.s32 %s37, 1
      %s39 = scalar_select %p36, %s37, %s38
      %p42 = pneg %p36
      %p43 = scmp.eq.s32.totalorder %s13, 1
      %p44 = por %p42, %p43
      %p45 = scmp.ne.s32.totalorder %s37, %s40
      %p46 = scmp.eq.s32.totalorder %s13, 0
      %p47 = por %p45, %p46
      %p48 = scmp.ne.s32.totalorder %s37, %s40
      %p49 = scmp.eq.s32.totalorder %s18, 1
      %p50 = por %p48, %p49
      %p51 = scmp.ne.s32.totalorder %s40, %s41
      %p52 = scmp.eq.s32.totalorder %s18, 0
      %p53 = por %p51, %p52
      %p54 = scmp.ne.s32.totalorder %s40, %s41
      %p55 = scmp.eq.s32.totalorder %s19, 1
      %p56 = por %p54, %p55
      %p58 = scmp.ne.s32.totalorder %s41, %s57
      %p59 = scmp.eq.s32.totalorder %s19, 0
      %p60 = por %p58, %p59
      %s61 = ssub.s32 %s20, %s32
      %s62 = ssub.s32 %s21, %s28
      %s63 = sor.u32 %s61, %s62
      %p64 = scmp.eq.s32.totalorder %s63, 0
      %s66 = sadd.s32 %s65, 1
      %s67 = scalar_select %p64, %s65, %s66
      %p70 = pneg %p64
      %p71 = scmp.eq.s32.totalorder %s13, 1
      %p72 = por %p70, %p71
      %p73 = scmp.ne.s32.totalorder %s65, %s68
      %p74 = scmp.eq.s32.totalorder %s13, 0
      %p75 = por %p73, %p74
      %p76 = scmp.ne.s32.totalorder %s65, %s68
      %p77 = scmp.eq.s32.totalorder %s18, 1
      %p78 = por %p76, %p77
      %p79 = scmp.ne.s32.totalorder %s68, %s69
      %p80 = scmp.eq.s32.totalorder %s18, 0
      %p81 = por %p79, %p80
      %p82 = scmp.ne.s32.totalorder %s68, %s69
      %p83 = scmp.eq.s32.totalorder %s19, 1
      %p84 = por %p82, %p83
      %p86 = scmp.ne.s32.totalorder %s69, %s85
      %p87 = scmp.eq.s32.totalorder %s19, 0
      %p88 = por %p86, %p87
      %s90 = sadd.s32 %s89, 1
      %p93 = scmp.eq.s32.totalorder %s13, 1
      %p94 = scmp.ne.s32.totalorder %s89, %s91
      %p95 = scmp.eq.s32.totalorder %s13, 0
      %p96 = por %p94, %p95
      %p97 = scmp.ne.s32.totalorder %s89, %s91
      %p98 = scmp.eq.s32.totalorder %s18, 1
      %p99 = por %p97, %p98
      %p100 = scmp.ne.s32.totalorder %s91, %s92
      %p101 = scmp.eq.s32.totalorder %s18, 0
      %p102 = por %p100, %p101
      %p103 = scmp.ne.s32.totalorder %s91, %s92
      %p104 = scmp.eq.s32.totalorder %s19, 1
      %p105 = por %p103, %p104
      %p107 = scmp.ne.s32.totalorder %s92, %s106
      %p108 = scmp.eq.s32.totalorder %s19, 0
      %p109 = por %p107, %p108
      %s111 = sadd.s32 %s110, 1
      %p114 = scmp.eq.s32.totalorder %s13, 1
      %p115 = scmp.ne.s32.totalorder %s110, %s112
      %p116 = scmp.eq.s32.totalorder %s13, 0
      %p117 = por %p115, %p116
      %p118 = scmp.ne.s32.totalorder %s110, %s112
      %p119 = scmp.eq.s32.totalorder %s18, 1
      %p120 = por %p118, %p119
      %p121 = scmp.ne.s32.totalorder %s112, %s113
      %p122 = scmp.eq.s32.totalorder %s18, 0
      %p123 = por %p121, %p122
      %p124 = scmp.ne.s32.totalorder %s112, %s113
      %p125 = scmp.eq.s32.totalorder %s19, 1
      %p126 = por %p124, %p125
      %p128 = scmp.ne.s32.totalorder %s113, %s127
      %p129 = scmp.eq.s32.totalorder %s19, 0
      %p130 = por %p128, %p129
      %s131 = ssub.s32 %s20, %s32
      %s132 = ssub.s32 %s21, %s28
      %s133 = sor.u32 %s131, %s132
      %p134 = scmp.eq.s32.totalorder %s133, 0
      %s136 = sadd.s32 %s135, 1
      %s137 = scalar_select %p134, %s135, %s136
      %p140 = pneg %p134
      %p141 = scmp.eq.s32.totalorder %s13, 1
      %p142 = por %p140, %p141
      %p143 = scmp.ne.s32.totalorder %s135, %s138
      %p144 = scmp.eq.s32.totalorder %s13, 0
      %p145 = por %p143, %p144
      %p146 = scmp.ne.s32.totalorder %s135, %s138
      %p147 = scmp.eq.s32.totalorder %s18, 1
      %p148 = por %p146, %p147
      %p149 = scmp.ne.s32.totalorder %s138, %s139
      %p150 = scmp.eq.s32.totalorder %s18, 0
      %p151 = por %p149, %p150
      %p152 = scmp.ne.s32.totalorder %s138, %s139
      %p153 = scmp.eq.s32.totalorder %s19, 1
      %p154 = por %p152, %p153
      %p156 = scmp.ne.s32.totalorder %s139, %s155
      %p157 = scmp.eq.s32.totalorder %s19, 0
      %p158 = por %p156, %p157
      %p159 = scmp.le.s32.totalorder 1, %s13
      %p160 = scmp.lt.s32.totalorder %s13, 3
      %p161 = pnand %p159, %p160
      %p162 = pneg %p161
      // Predicated region
      $region9: #{tpu_custom_call.1} parent=5 // pred_check
        _
      $region10: #{tpu_custom_call.1} parent=5 // pred_check_branch
        %164 = sbr.rel (%p161) target = $region12
      $region11: #{tpu_custom_call.1} parent=5 // pred_region
        %s165 = ssub.s32 %s13, 1
        // Predicated region
        $region13: #{tpu_custom_call.1} parent=11 // pred_check
          %p166 = pneg %p102
        $region14: #{tpu_custom_call.1} parent=11 // pred_check_branch
          %168 = sbr.rel (%p166) target = $region16
        $region15: #{tpu_custom_call.1} parent=11 // pred_region
          _
        $region16: #{tpu_custom_call.1} parent=11 // pred_fallthru
          _
        // Predicated region
        $region17: #{tpu_custom_call.1} parent=11 // pred_check
          %p169 = pneg %p123
        $region18: #{tpu_custom_call.1} parent=11 // pred_check_branch
          %171 = sbr.rel (%p169) target = $region20
        $region19: #{tpu_custom_call.1} parent=11 // pred_region
          _
        $region20: #{tpu_custom_call.1} parent=11 // pred_fallthru
          _
      $region12: #{tpu_custom_call.1} parent=5 // pred_fallthru
        _
      %p172 = scmp.lt.s32.totalorder %s13, 2
      // Predicated region
      $region21: #{tpu_custom_call.1} parent=5 // pred_check
        %p173 = pneg %p172
      $region22: #{tpu_custom_call.1} parent=5 // pred_check_branch
        %175 = sbr.rel (%p173) target = $region24
      $region23: #{tpu_custom_call.1} parent=5 // pred_region
        // Predicated region
        $region25: #{tpu_custom_call.1} parent=23 // pred_check
          %p176 = pneg %p47
        $region26: #{tpu_custom_call.1} parent=23 // pred_check_branch
          %178 = sbr.rel (%p176) target = $region28
        $region27: #{tpu_custom_call.1} parent=23 // pred_region
          %s179 = smul.u32 2, %s21
          %p180 = scmp.lt.s32.totalorder %s20, 1
          %s181 = scalar_select %p180, %s20, 1
          %p182 = scmp.lt.s32.totalorder %s179, 1
          %s183 = scalar_select %p182, %s179, 1
          %s184 = smul.addr %s181, 2
          %s185 = sadd.s32 %s183, %s184
          %s186 = smul.addr %s185, 8
          %s187 = scalar_lea.vmem %s0, %s186
          %s188 = smul.u32 2, %s21
        $region28: #{tpu_custom_call.1} parent=23 // pred_fallthru
          _
        // Predicated region
        $region29: #{tpu_custom_call.1} parent=23 // pred_check
          %p189 = pneg %p75
        $region30: #{tpu_custom_call.1} parent=23 // pred_check_branch
          %191 = sbr.rel (%p189) target = $region32
        $region31: #{tpu_custom_call.1} parent=23 // pred_region
          %p192 = scmp.lt.s32.totalorder %s20, 1
          %s193 = scalar_select %p192, %s20, 1
          %p194 = scmp.lt.s32.totalorder %s21, 0
          %s195 = scalar_select %p194, %s21, 0
          %s196 = sadd.s32 %s195, %s193
          %s197 = smul.addr %s196, 4
          %s198 = scalar_lea.vmem %s1, %s197
        $region32: #{tpu_custom_call.1} parent=23 // pred_fallthru
          _
      $region24: #{tpu_custom_call.1} parent=5 // pred_fallthru
        _
      %p199 = scmp.le.s32.totalorder 1, %s13
      %p200 = scmp.lt.s32.totalorder %s13, 3
      %p201 = pnand %p199, %p200
      %p202 = pneg %p201
      // Predicated region
      $region33: #{tpu_custom_call.1} parent=5 // pred_check
        _
      $region34: #{tpu_custom_call.1} parent=5 // pred_check_branch
        %204 = sbr.rel (%p201) target = $region36
      $region35: #{tpu_custom_call.1} parent=5 // pred_region
        %s205 = ssub.s32 %s13, 1
        %s206 = smul.u32 2, %s23
        %p207 = scmp.lt.s32.totalorder %s22, 1
        %s208 = scalar_select %p207, %s22, 1
        %p209 = scmp.lt.s32.totalorder %s206, 1
        %s210 = scalar_select %p209, %s206, 1
        %s211 = smul.addr %s208, 2
        %s212 = sadd.s32 %s210, %s211
        %s213 = smul.addr %s212, 8
        %s214 = scalar_lea.vmem %s0, %s213
        %p215 = pneg %p53
        %p216 = pneg %p50
        %p217 = scmp.lt.s32.totalorder %s22, 1
        %s218 = scalar_select %p217, %s22, 1
        %p219 = scmp.lt.s32.totalorder %s23, 0
        %s220 = scalar_select %p219, %s23, 0
        %s221 = sadd.s32 %s220, %s218
        %s222 = smul.addr %s221, 4
        %s223 = scalar_lea.vmem %s1, %s222
        %p224 = pneg %p81
        %p225 = pneg %p78
        %p226 = pneg %p102
        %p227 = pneg %p99
        %p228 = pneg %p123
        %p229 = pneg %p120
        %p230 = pneg %p151
        %p231 = pneg %p148
        %s232 = sand.u32 %s138, 1
        %s233 = scalar_lea.sflag [#allocation3], %s232
        %s234 = sand.u32 %s138, 1
        %s235 = smul.addr %s234, 16
        %s236 = scalar_lea.vmem [#allocation2], %s235
        %s237 = smul.u32 2, %s23
        %p238 = scmp.lt.s32.totalorder %s22, 1
        %s239 = scalar_select %p238, %s22, 1
        %p240 = scmp.lt.s32.totalorder %s237, 1
        %s241 = scalar_select %p240, %s237, 1
        %s242 = smul.addr %s239, 2
        %s243 = sadd.s32 %s241, %s242
        %s244 = smul.addr %s243, 8
        %s245 = scalar_lea.vmem %s0, %s244
        %s246 = smul.u32 2, %s23
        %p247 = scmp.lt.s32.totalorder %s22, 1
        %s248 = scalar_select %p247, %s22, 1
        %p249 = scmp.lt.s32.totalorder %s23, 0
        %s250 = scalar_select %p249, %s23, 0
        %s251 = sadd.s32 %s250, %s248
        %s252 = smul.addr %s251, 4
        %s253 = scalar_lea.vmem %s1, %s252
        %s254 = smul.u32 2, %s23
        %v256 = vld [vmem:[%s245] sm:$0xff]
        %v257 = vld [vmem:[%s245 + $0x8] sm:$0xff]
        %v258 = vld [vmem:[%s253] sm:$0xf]
        %v259 = vpack.c.bf16 %v257, %v256
        %v260 = vld [vmem:[%s2] sm:$0xff]
        %v261 = vpack.c.bf16 %v260, %v260
        %v262 = vpack.c.bf16 %v258, %v258
        %s263 = scalar_lea.vmem %s2, 8
        %v264 = vld [vmem:[%s263] sm:$0xff]
        %v265 = vpack.c.bf16 %v264, %v264
        %vm266 = vsmask.f32 7424
        %v268 = vshrl.u32 %v259, 16
        %v270 = vshll.u32 %v259, 16
        %v272 = vrot.slane %v270, 1
        %v273 = vor.u32 %v268, %v272
        %v275 = vshll.u32 %v262, 16
        %v277 = vrot.slane %v275, 1
        %v278 = vsel %vm266, %v273, %v277
        %vm279 = vcmask 64512
        %v281 = vsel %vm279, %v278, 0
        %vm283 = vcmask 1043456
        %v285 = vsel %vm283, %v265, 0
        %287 = vmatprep.subr.bf16.mxu0 0
        %288 = vmatpush1.bf16.msra.mxu0 %v285
        %289 = vmatprep.subr.bf16.mxu0 0
        %290 = vmatpush1.bf16.msra.mxu0 0
        %291 = vmatprep.subr.bf16.mxu0 0
        %292 = vmatpush1.bf16.msra.mxu0 0
        %293 = vmatprep.subr.bf16.mxu0 0
        %294 = vmatpush1.bf16.msra.mxu0 0
        %295 = vmatprep.subr.bf16.mxu0 0
        %296 = vmatpush1.bf16.msra.mxu0 0
        %297 = vmatprep.subr.bf16.mxu0 0
        %298 = vmatpush1.bf16.msra.mxu0 0
        %299 = vmatprep.subr.bf16.mxu0 0
        %300 = vmatpush1.bf16.msra.mxu0 0
        %301 = vmatprep.subr.bf16.mxu0 0
        %302 = vmatpush1.bf16.msra.mxu0 0
        %303 = vmatprep.subr.bf16.mxu0 0
        %304 = vmatpush1.bf16.msra.mxu0 0
        %305 = vmatprep.subr.bf16.mxu0 0
        %306 = vmatpush1.bf16.msra.mxu0 0
        %307 = vmatprep.subr.bf16.mxu0 0
        %308 = vmatpush1.bf16.msra.mxu0 0
        %309 = vmatprep.subr.bf16.mxu0 0
        %310 = vmatpush1.bf16.msra.mxu0 0
        %311 = vmatprep.subr.bf16.mxu0 0
        %312 = vmatpush1.bf16.msra.mxu0 0
        %313 = vmatprep.subr.bf16.mxu0 0
        %314 = vmatpush1.bf16.msra.mxu0 0
        %315 = vmatprep.subr.bf16.mxu0 0
        %316 = vmatpush1.bf16.msra.mxu0 0
        %317 = vmatprep.subr.bf16.mxu0 0
        %318 = vmatpush1.bf16.msra.mxu0 0
        %319 = vmatprep.mubr.bf16.mxu0 0
        %320 = vmatmul.mubr.bf16.gmra.mrb[0].mxu0 %v281
        %v321 = vpop.f32.mrb[0].mxu0
        %v322 = vadd.f32 0.0, %v321
        %v323 = vpop.f32.mrb[0].mxu0
        %v324 = vpop.f32.mrb[0].mxu0
        %v325 = vadd.f32 0.0, %v324
        %v326 = vpop.f32.mrb[0].mxu0
        %327 = vdwg.mxu0
        %v328 = vsel %vm279, %v259, 0
        %v331 = vsel %vm283, %v261, 0
        %333 = vmatprep.subr.bf16.mxu0 0
        %334 = vmatpush1.bf16.msra.mxu0 %v331
        %335 = vmatprep.subr.bf16.mxu0 0
        %336 = vmatpush1.bf16.msra.mxu0 0
        %337 = vmatprep.subr.bf16.mxu0 0
        %338 = vmatpush1.bf16.msra.mxu0 0
        %339 = vmatprep.subr.bf16.mxu0 0
        %340 = vmatpush1.bf16.msra.mxu0 0
        %341 = vmatprep.subr.bf16.mxu0 0
        %342 = vmatpush1.bf16.msra.mxu0 0
        %343 = vmatprep.subr.bf16.mxu0 0
        %344 = vmatpush1.bf16.msra.mxu0 0
        %345 = vmatprep.subr.bf16.mxu0 0
        %346 = vmatpush1.bf16.msra.mxu0 0
        %347 = vmatprep.subr.bf16.mxu0 0
        %348 = vmatpush1.bf16.msra.mxu0 0
        %349 = vmatprep.subr.bf16.mxu0 0
        %350 = vmatpush1.bf16.msra.mxu0 0
        %351 = vmatprep.subr.bf16.mxu0 0
        %352 = vmatpush1.bf16.msra.mxu0 0
        %353 = vmatprep.subr.bf16.mxu0 0
        %354 = vmatpush1.bf16.msra.mxu0 0
        %355 = vmatprep.subr.bf16.mxu0 0
        %356 = vmatpush1.bf16.msra.mxu0 0
        %357 = vmatprep.subr.bf16.mxu0 0
        %358 = vmatpush1.bf16.msra.mxu0 0
        %359 = vmatprep.subr.bf16.mxu0 0
        %360 = vmatpush1.bf16.msra.mxu0 0
        %361 = vmatprep.subr.bf16.mxu0 0
        %362 = vmatpush1.bf16.msra.mxu0 0
        %363 = vmatprep.subr.bf16.mxu0 0
        %364 = vmatpush1.bf16.msra.mxu0 0
        %365 = vmatprep.mubr.bf16.mxu0 0
        %366 = vmatmul.mubr.bf16.gmra.mrb[0].mxu0 %v328
        %v367 = vpop.f32.mrb[0].mxu0
        %v368 = vadd.f32 %v322, %v367
        %v369 = vpop.f32.mrb[0].mxu0
        %v370 = vpop.f32.mrb[0].mxu0
        %v371 = vadd.f32 %v325, %v370
        %v372 = vpop.f32.mrb[0].mxu0
        %373 = vdwg.mxu0
        %s374 = scalar_lea.vmem %s2, 16
        %v375 = vld [vmem:[%s374] sm:$0xff]
        %v376 = vpack.c.bf16 %v375, %v375
        %vm379 = vcmask 1046528
        %v380 = vrot.slane %v259, 1
        %v381 = vrot.slane %v262, 1
        %v382 = vsel %vm379, %v380, %v381
        %v384 = vsel %vm279, %v382, 0
        %v387 = vsel %vm283, %v376, 0
        %389 = vmatprep.subr.bf16.mxu0 0
        %390 = vmatpush1.bf16.msra.mxu0 %v387
        %391 = vmatprep.subr.bf16.mxu0 0
        %392 = vmatpush1.bf16.msra.mxu0 0
        %393 = vmatprep.subr.bf16.mxu0 0
        %394 = vmatpush1.bf16.msra.mxu0 0
        %395 = vmatprep.subr.bf16.mxu0 0
        %396 = vmatpush1.bf16.msra.mxu0 0
        %397 = vmatprep.subr.bf16.mxu0 0
        %398 = vmatpush1.bf16.msra.mxu0 0
        %399 = vmatprep.subr.bf16.mxu0 0
        %400 = vmatpush1.bf16.msra.mxu0 0
        %401 = vmatprep.subr.bf16.mxu0 0
        %402 = vmatpush1.bf16.msra.mxu0 0
        %403 = vmatprep.subr.bf16.mxu0 0
        %404 = vmatpush1.bf16.msra.mxu0 0
        %405 = vmatprep.subr.bf16.mxu0 0
        %406 = vmatpush1.bf16.msra.mxu0 0
        %407 = vmatprep.subr.bf16.mxu0 0
        %408 = vmatpush1.bf16.msra.mxu0 0
        %409 = vmatprep.subr.bf16.mxu0 0
        %410 = vmatpush1.bf16.msra.mxu0 0
        %411 = vmatprep.subr.bf16.mxu0 0
        %412 = vmatpush1.bf16.msra.mxu0 0
        %413 = vmatprep.subr.bf16.mxu0 0
        %414 = vmatpush1.bf16.msra.mxu0 0
        %415 = vmatprep.subr.bf16.mxu0 0
        %416 = vmatpush1.bf16.msra.mxu0 0
        %417 = vmatprep.subr.bf16.mxu0 0
        %418 = vmatpush1.bf16.msra.mxu0 0
        %419 = vmatprep.subr.bf16.mxu0 0
        %420 = vmatpush1.bf16.msra.mxu0 0
        %421 = vmatprep.mubr.bf16.mxu0 0
        %422 = vmatmul.mubr.bf16.gmra.mrb[0].mxu0 %v384
        %v423 = vpop.f32.mrb[0].mxu0
        %v424 = vadd.f32 0.0, %v423
        %v425 = vpop.f32.mrb[0].mxu0
        %v426 = vpop.f32.mrb[0].mxu0
        %v427 = vadd.f32 0.0, %v426
        %v428 = vpop.f32.mrb[0].mxu0
        %429 = vdwg.mxu0
        %v430 = vadd.f32 %v368, %v424
        %v431 = vadd.f32 %v371, %v427
        %s432 = scalar_lea.vmem %s2, 24
        %v433 = vld [vmem:[%s432] sm:$0xff]
        %v434 = vpack.c.bf16 %v433, %v433
        %vm435 = vsmask.f32 6400
        %v436 = vrot.slane %v268, 1
        %v437 = vrot.slane %v270, 2
        %v438 = vor.u32 %v436, %v437
        %v439 = vshrl.u32 %v262, 16
        %v441 = vrot.slane %v439, 1
        %v442 = vrot.slane %v275, 2
        %v443 = vor.u32 %v441, %v442
        %v444 = vsel %vm435, %v438, %v443
        %v446 = vsel %vm279, %v444, 0
        %v449 = vsel %vm283, %v434, 0
        %451 = vmatprep.subr.bf16.mxu0 0
        %452 = vmatpush1.bf16.msra.mxu0 %v449
        %453 = vmatprep.subr.bf16.mxu0 0
        %454 = vmatpush1.bf16.msra.mxu0 0
        %455 = vmatprep.subr.bf16.mxu0 0
        %456 = vmatpush1.bf16.msra.mxu0 0
        %457 = vmatprep.subr.bf16.mxu0 0
        %458 = vmatpush1.bf16.msra.mxu0 0
        %459 = vmatprep.subr.bf16.mxu0 0
        %460 = vmatpush1.bf16.msra.mxu0 0
        %461 = vmatprep.subr.bf16.mxu0 0
        %462 = vmatpush1.bf16.msra.mxu0 0
        %463 = vmatprep.subr.bf16.mxu0 0
        %464 = vmatpush1.bf16.msra.mxu0 0
        %465 = vmatprep.subr.bf16.mxu0 0
        %466 = vmatpush1.bf16.msra.mxu0 0
        %467 = vmatprep.subr.bf16.mxu0 0
        %468 = vmatpush1.bf16.msra.mxu0 0
        %469 = vmatprep.subr.bf16.mxu0 0
        %470 = vmatpush1.bf16.msra.mxu0 0
        %471 = vmatprep.subr.bf16.mxu0 0
        %472 = vmatpush1.bf16.msra.mxu0 0
        %473 = vmatprep.subr.bf16.mxu0 0
        %474 = vmatpush1.bf16.msra.mxu0 0
        %475 = vmatprep.subr.bf16.mxu0 0
        %476 = vmatpush1.bf16.msra.mxu0 0
        %477 = vmatprep.subr.bf16.mxu0 0
        %478 = vmatpush1.bf16.msra.mxu0 0
        %479 = vmatprep.subr.bf16.mxu0 0
        %480 = vmatpush1.bf16.msra.mxu0 0
        %481 = vmatprep.subr.bf16.mxu0 0
        %482 = vmatpush1.bf16.msra.mxu0 0
        %483 = vmatprep.mubr.bf16.mxu0 0
        %484 = vmatmul.mubr.bf16.gmra.mrb[0].mxu0 %v446
        %v485 = vpop.f32.mrb[0].mxu0
        %v486 = vadd.f32 0.0, %v485
        %v487 = vpop.f32.mrb[0].mxu0
        %v488 = vpop.f32.mrb[0].mxu0
        %v489 = vadd.f32 0.0, %v488
        %v490 = vpop.f32.mrb[0].mxu0
        %491 = vdwg.mxu0
        %v492 = vadd.f32 %v430, %v486
        %v493 = vadd.f32 %v431, %v489
        %s494 = scalar_lea.vmem %s2, 32
        %v495 = vld [vmem:[%s494] sm:$0xff]
        %v496 = vpack.c.bf16 %v495, %v495
        %vm497 = vcmask 1045504
        %v498 = vrot.slane %v259, 2
        %v499 = vrot.slane %v262, 2
        %v500 = vsel %vm497, %v498, %v499
        %v502 = vsel %vm279, %v500, 0
        %v505 = vsel %vm283, %v496, 0
        %507 = vmatprep.subr.bf16.mxu0 0
        %508 = vmatpush1.bf16.msra.mxu0 %v505
        %509 = vmatprep.subr.bf16.mxu0 0
        %510 = vmatpush1.bf16.msra.mxu0 0
        %511 = vmatprep.subr.bf16.mxu0 0
        %512 = vmatpush1.bf16.msra.mxu0 0
        %513 = vmatprep.subr.bf16.mxu0 0
        %514 = vmatpush1.bf16.msra.mxu0 0
        %515 = vmatprep.subr.bf16.mxu0 0
        %516 = vmatpush1.bf16.msra.mxu0 0
        %517 = vmatprep.subr.bf16.mxu0 0
        %518 = vmatpush1.bf16.msra.mxu0 0
        %519 = vmatprep.subr.bf16.mxu0 0
        %520 = vmatpush1.bf16.msra.mxu0 0
        %521 = vmatprep.subr.bf16.mxu0 0
        %522 = vmatpush1.bf16.msra.mxu0 0
        %523 = vmatprep.subr.bf16.mxu0 0
        %524 = vmatpush1.bf16.msra.mxu0 0
        %525 = vmatprep.subr.bf16.mxu0 0
        %526 = vmatpush1.bf16.msra.mxu0 0
        %527 = vmatprep.subr.bf16.mxu0 0
        %528 = vmatpush1.bf16.msra.mxu0 0
        %529 = vmatprep.subr.bf16.mxu0 0
        %530 = vmatpush1.bf16.msra.mxu0 0
        %531 = vmatprep.subr.bf16.mxu0 0
        %532 = vmatpush1.bf16.msra.mxu0 0
        %533 = vmatprep.subr.bf16.mxu0 0
        %534 = vmatpush1.bf16.msra.mxu0 0
        %535 = vmatprep.subr.bf16.mxu0 0
        %536 = vmatpush1.bf16.msra.mxu0 0
        %537 = vmatprep.subr.bf16.mxu0 0
        %538 = vmatpush1.bf16.msra.mxu0 0
        %539 = vmatprep.mubr.bf16.mxu0 0
        %540 = vmatmul.mubr.bf16.gmra.mrb[0].mxu0 %v502
        %v541 = vpop.f32.mrb[0].mxu0
        %v542 = vadd.f32 0.0, %v541
        %v543 = vpop.f32.mrb[0].mxu0
        %v544 = vpop.f32.mrb[0].mxu0
        %v545 = vadd.f32 0.0, %v544
        %v546 = vpop.f32.mrb[0].mxu0
        %547 = vdwg.mxu0
        %v548 = vadd.f32 %v492, %v542
        %v549 = vadd.f32 %v493, %v545
        %v550 = vld [vmem:[%s3] sm:$0x1]
        %v552 = vlaneseq
        %v553 = vshrl.u32 %v552, 7
        %v554 = vsub.s32 0, %v553
        %v555 = vrot.slane %v550, %v554
        %v557 = vadd.f32 %v548, %v555
        %v558 = vadd.f32 %v549, %v555
        %v559 = vmul.f32 %v557, 0.5
        %v560 = vmul.f32 %v558, 0.5
        %v561 = vmul.f32 %v557, 0.70710677
        %v562 = vmul.f32 %v558, 0.70710677
        %v563 = vand.u32 2147483647, %v561
        %v564 = vand.u32 2147483647, %v562
        %v565 = vmul.f32 %v563, 0.3275911
        %v566 = vmul.f32 %v564, 0.3275911
        %v567 = vadd.f32 %v565, 1.0
        %v568 = vadd.f32 %v566, 1.0
        %v569 = vrcp.pop %v567
        %v570 = vmul.f32 1.0, %v569
        %v571 = vrcp.pop %v568
        %v572 = vmul.f32 1.0, %v571
        %v573 = vmul.f32 %v570, 1.0614054
        %v574 = vmul.f32 %v572, 1.0614054
        %v575 = vadd.f32 %v573, -1.4531521
        %v576 = vadd.f32 %v574, -1.4531521
        %v577 = vmul.f32 %v575, %v570
        %v578 = vmul.f32 %v576, %v572
        %v579 = vadd.f32 %v577, 1.4214138
        %v580 = vadd.f32 %v578, 1.4214138
        %v581 = vmul.f32 %v579, %v570
        %v582 = vmul.f32 %v580, %v572
        %v583 = vadd.f32 %v581, -0.28449672
        %v584 = vadd.f32 %v582, -0.28449672
        %v585 = vmul.f32 %v583, %v570
        %v586 = vmul.f32 %v584, %v572
        %v587 = vadd.f32 %v585, 0.2548296
        %v588 = vadd.f32 %v586, 0.2548296
        %v589 = vmul.f32 %v587, %v570
        %v590 = vmul.f32 %v588, %v572
        %v591 = vsub.f32 0.0, %v563
        %v592 = vsub.f32 0.0, %v564
        %v593 = vmul.f32 %v591, %v563
        %v594 = vmul.f32 %v592, %v564
        %v595 = vmul.f32 %v593, 1.442695
        %v596 = vpow.pop %v595
        %v597 = vmul.f32 %v594, 1.442695
        %v598 = vpow.pop %v597
        %v599 = vmul.f32 %v589, %v596
        %v600 = vmul.f32 %v590, %v598
        %v601 = vsub.f32 1.0, %v599
        %v602 = vsub.f32 1.0, %v600
        %vm603 = vcmp.ge.f32.partialorder %v561, 0.0
        %vm604 = vcmp.ge.f32.partialorder %v562, 0.0
        %v605 = vsub.f32 0.0, %v601
        %v606 = vsub.f32 0.0, %v602
        %v607 = vsel %vm603, %v601, %v605
        %v608 = vsel %vm604, %v602, %v606
        %v609 = vadd.f32 %v607, 1.0
        %v610 = vadd.f32 %v608, 1.0
        %v611 = vmul.f32 %v559, %v609
        %v612 = vmul.f32 %v560, %v610
        %613 = vst [vmem:[%s236] sm:$0xff] %v611
        %614 = vst [vmem:[%s236 + $0x8] sm:$0xff] %v612
        %s615 = sand.u32 %s138, 1
        %s616 = scalar_lea.sflag [#allocation3], %s615
        %s617 = sand.u32 %s138, 1
        %s618 = smul.addr %s617, 16
        %s619 = scalar_lea.vmem [#allocation2], %s618
        // Predicated region
        $region37: #{tpu_custom_call.1} parent=35 // pred_check
          %p620 = pneg %p148
        $region38: #{tpu_custom_call.1} parent=35 // pred_check_branch
          %622 = sbr.rel (%p620) target = $region40
        $region39: #{tpu_custom_call.1} parent=35 // pred_region
          %s623 = smul.u32 2, %s23
          %s625 = ssub.s32 256, 256
          %626 = vsyncadd %s616, %s625
          %s627 = smul.addr %s22, 2
          %s628 = sadd.s32 %s623, %s627
          %s629 = smul.addr %s628, 128
          %s630 = scalar_lea.hbm %s4, %s629
          %s631 = sshll.u32 %s619, 4
          %s632 = int_to_ptr.vmem [resolvable:$true] %s631
          %637 = dma.vmem_to_hbm [thread:$0]  %s632, 256, %s630, %s616, 128, 128, 8
        $region40: #{tpu_custom_call.1} parent=35 // pred_fallthru
          _
      $region36: #{tpu_custom_call.1} parent=5 // pred_fallthru
        _
      %p638 = scmp.le.s32.totalorder 2, %s13
      // Predicated region
      $region41: #{tpu_custom_call.1} parent=5 // pred_check
        %p639 = pneg %p638
      $region42: #{tpu_custom_call.1} parent=5 // pred_check_branch
        %641 = sbr.rel (%p639) target = $region44
      $region43: #{tpu_custom_call.1} parent=5 // pred_region
        %s642 = ssub.s32 %s13, 2
        // Predicated region
        $region45: #{tpu_custom_call.1} parent=43 // pred_check
          %p643 = pneg %p154
        $region46: #{tpu_custom_call.1} parent=43 // pred_check_branch
          %645 = sbr.rel (%p643) target = $region48
        $region47: #{tpu_custom_call.1} parent=43 // pred_region
          %s646 = sand.u32 %s139, 1
          %s647 = scalar_lea.sflag [#allocation3], %s646
          %s648 = sand.u32 %s139, 1
          %s649 = smul.addr %s648, 16
          %s650 = scalar_lea.vmem [#allocation2], %s649
          %651 = dma.done %s647, 256
        $region48: #{tpu_custom_call.1} parent=43 // pred_fallthru
          _
      $region44: #{tpu_custom_call.1} parent=5 // pred_fallthru
        _
    $region6: #{tpu_custom_call.1} parent=1 // loop_footer
      %s17 = sadd.s32 1, %s13
    $region7: #{tpu_custom_call.1} parent=1 // loop_footer_branch
      %12 = sbr.rel target = $region3
    $region8: #{tpu_custom_call.1} parent=1 // loop_exit
      _
    %652 = vsyncpa [#allocation3], 1
    %s653 = scalar_lea.sflag [#allocation3], 1
    %654 = vsyncpa %s653, 1

</llo_original>
